<compile_context>
chip_gen: v5e
topology: v5e:2x2
jax: 0.10.0
libtpu: 0.0.40
codegen_flags: <defaults>
</compile_context>

<pallas_src>
import math
import numpy as np
import jax
import jax.numpy as jnp
from jax.experimental import pallas as pl
from jax.experimental.pallas import tpu as pltpu


def _elu(z):
    return jnp.where(z > 0, z, jnp.exp(jnp.minimum(z, 0.0)) - 1.0)


# ----------------------------- Pallas kernels --------------------------------
def spatial_block_kernel_fused(x_ref, w_ref, b_ref, o_ref):
    # x_ref: (TM, V*C)  w_ref: (V*C, 2*V*Cout)  b_ref: (1, 2*V*Cout) f32  o_ref: (TM, V*Cout)
    vcout = o_ref.shape[1]
    y = jnp.dot(x_ref[...], w_ref[...], preferred_element_type=jnp.float32) + b_ref[...]
    g = _elu(y[:, :vcout])        # graph branch: elu(splineconv + root + bias)
    r = _elu(y[:, vcout:])        # residual branch: elu(1x1 conv + bias)
    o_ref[...] = _elu(g + r).astype(o_ref.dtype)


def spatial_block_kernel_resin(x_ref, w_ref, b_ref, r_ref, o_ref):
    # Large-V*C path: graph matmul only; pre-ELU residual streamed in as a lane-dense input.
    y = jnp.dot(x_ref[...], w_ref[...], preferred_element_type=jnp.float32) + b_ref[...]
    o_ref[...] = _elu(_elu(y) + _elu(r_ref[...].astype(jnp.float32))).astype(o_ref.dtype)


# --------------------------- glue: spline basis ------------------------------
def spline_basis_deg1(pseudo, kernel_size, is_open_spline):
    """Degree-1 B-spline basis, matching torch_spline_conv basis_fw."""
    E, dim = pseudo.shape
    S = 2 ** dim
    ks = np.asarray(kernel_size, dtype=np.int64)
    op = np.asarray(is_open_spline, dtype=np.int64)
    basis = jnp.ones((E, S), dtype=pseudo.dtype)
    wi = jnp.zeros((E, S), dtype=jnp.int32)
    wi_offset = 1
    for d in range(dim):
        v = pseudo[:, d] * (ks[d] - op[d])          # degree = 1
        vf = jnp.floor(v)
        frac = v - vf
        k_mod = np.array([(s >> d) & 1 for s in range(S)], dtype=np.int32)   # (S,)
        b_d = jnp.where(k_mod[None, :] == 0, (1.0 - frac)[:, None], frac[:, None])
        basis = basis * b_d
        idx = (vf.astype(jnp.int32)[:, None] + k_mod[None, :]) % int(ks[d])
        wi = wi + idx * wi_offset
        wi_offset *= int(ks[d])
    return basis, wi


def build_dense_spline_operator(edge_index_base, pseudo_base, V, kernel_size, is_open_spline):
    # NOTE: assumes every batch replica carries the same base graph / pseudo-coords (the tiled
    # edge_index the module receives); per-sample graphs would need per-sample operators.
    row = edge_index_base[0]
    col = edge_index_base[1]
    basis, wi = spline_basis_deg1(pseudo_base, kernel_size, is_open_spline)
    E, S = basis.shape
    K = int(np.prod(kernel_size))
    row_b = jnp.broadcast_to(row[:, None], (E, S)).reshape(-1)
    col_b = jnp.broadcast_to(col[:, None], (E, S)).reshape(-1)
    A = jnp.zeros((K, V, V), dtype=basis.dtype)
    A = A.at[wi.reshape(-1), row_b, col_b].add(basis.reshape(-1))
    return A


def build_graph_operator(A, params, V):
    """Fold spline operator + weights + root into one (V*C, V*Cout) matrix + tiled bias row."""
    W, root, bias = params['weight'], params['root'], params['bias']
    C, Cout = root.shape
    eye = jnp.eye(V, dtype=A.dtype)
    Lg = (jnp.einsum('kvu,kco->ucvo', A, W)
          + jnp.einsum('uv,co->ucvo', eye, root)).reshape(V * C, V * Cout)
    bg = jnp.tile(bias, V).reshape(1, V * Cout)
    return Lg, bg


def build_residual_operator(params, V):
    """Block-diagonal identity(V) x WresT operator for the fused small-V*C path."""
    Wres, bres = params['res_weight'], params['res_bias']
    Cout, C = Wres.shape
    eye = jnp.eye(V, dtype=Wres.dtype)
    Lr = jnp.einsum('uv,co->ucvo', eye, Wres.T).reshape(V * C, V * Cout)
    br = jnp.tile(bres, V).reshape(1, V * Cout)
    return Lr, br


# ------------------------- tiling / hardware helpers --------------------------
def _num_tensorcores():
    """Best-effort TensorCore count per device (2 on v7x/v4 megacore, 1 on v5e/v6e)."""
    try:
        dev = jax.devices()[0]
        nc = getattr(dev, "num_cores", None)
        if nc:
            return max(1, int(nc))
        kind = str(getattr(dev, "device_kind", "")).lower()
        if "v7" in kind or "v4" in kind:
            return 2
    except Exception:
        pass
    return 1


def _pick_tm(M, row_bytes, fixed_bytes, num_cores=1, tile_budget_bytes=8 << 20):
    """Replica rows per grid step.

    VMEM-aware (double-buffered per-row blocks + single-buffered operator must fit the budget)
    and core-aware (>= 2*num_cores grid steps on multi-TC parts so the "parallel" axis shards
    replicas across TensorCores).  Never returns a block bigger than the budget allows; callers
    zero-pad M up to a multiple of the result when no clean divisor exists.
    """
    avail = max(tile_budget_bytes - fixed_bytes, 1 << 20)
    cap = min(2048, int(avail // max(row_bytes, 1)))
    cap = max(8, (cap // 8) * 8)
    if num_cores > 1:
        per_core = -(-M // (2 * num_cores))                 # ceil(M / (2*cores))
        cap = min(cap, max(8, ((per_core + 7) // 8) * 8))
    if M <= cap and num_cores == 1:
        return M                                            # whole problem in one grid step
    start = (min(cap, M) // 8) * 8
    for tm in range(start, 7, -8):
        if M % tm == 0:
            return tm                                       # largest multiple-of-8 divisor <= cap
    return max(8, start)                                    # no clean divisor: caller pads M


# ------------------------------ forward wrappers ------------------------------
def spatial_block_forward_replica_major(x_tnvc, edge_index, edge_attr, params, kernel_size,
                                        is_open_spline, *, compute_dtype=jnp.bfloat16,
                                        out_dtype=jnp.float32, split_residual=None):
    """Production entry point: replica-major (T, N, V, C) in, (T, N, V, Cout) out, no transposes."""
    T, N, V, C = x_tnvc.shape
    Cout = params['root'].shape[1]
    VC, VCout = V * C, V * Cout

    # expand(): base edge set replicated identically per (n, t) replica (sample_rate=None path).
    # TODO(synk): sample_rate-based random edge subsampling in expand() is not implemented.
    E_base = edge_index.shape[1] // N
    A = build_dense_spline_operator(edge_index[:, :E_base], edge_attr[:E_base],
                                    V, kernel_size, is_open_spline)
    Lg, bg = build_graph_operator(A, params, V)

    if split_residual is None:
        split_residual = VC >= 512      # drop the block-diag residual half once it costs real VMEM/MXU

    M = T * N
    Xr = x_tnvc.reshape(M, VC)          # contiguous view of the replica-major layout (no HBM transpose)
    # bf16 inputs halve X/operator HBM traffic and hit the native bf16 MXU; accumulation and the
    # ELU epilogue stay f32.  TODO(synk): keep activations bf16 end-to-end upstream so this cast
    # becomes a no-op instead of an extra XLA pass.
    Xc = Xr.astype(compute_dtype)

    num_cores = _num_tensorcores()
    x_row = VC * np.dtype(compute_dtype).itemsize
    out_row = VCout * np.dtype(out_dtype).itemsize
    cparams = dict(dimension_semantics=("parallel",), vmem_limit_bytes=32 * 1024 * 1024)

    if not split_residual:
        # Small-V*C path: fold graph + residual into ONE matmul with 2*V*Cout output lanes.
        Lr, br = build_residual_operator(params, V)
        Wop = jnp.concatenate([Lg, Lr], axis=1).astype(compute_dtype)     # (VC, 2*VCout)
        bop = jnp.concatenate([bg, br], axis=1)                           # (1, 2*VCout) f32
        width = 2 * VCout
        fixed = int(Wop.size) * np.dtype(compute_dtype).itemsize + int(bop.size) * 4
        TM = _pick_tm(M, 2 * (x_row + out_row), fixed, num_cores)
        Mp = -(-M // TM) * TM
        if Mp != M:
            Xc = jnp.pad(Xc, ((0, Mp - M), (0, 0)))
        cost = pl.CostEstimate(flops=2 * Mp * VC * width,
                               transcendentals=3 * Mp * VCout,
                               bytes_accessed=Mp * (x_row + out_row) + fixed)
        out = pl.pallas_call(
            spatial_block_kernel_fused,
            out_shape=jax.ShapeDtypeStruct((Mp, VCout), out_dtype),
            grid_spec=pltpu.PrefetchScalarGridSpec(
                num_scalar_prefetch=0,
                grid=(Mp // TM,),
                in_specs=[
                    pl.BlockSpec((TM, VC), lambda i: (i, 0)),
                    # grid-constant operator / bias: single-buffered to halve resident VMEM
                    pl.BlockSpec((VC, width), lambda i: (0, 0), pipeline_mode=pl.Buffered(1)),
                    pl.BlockSpec((1, width), lambda i: (0, 0), pipeline_mode=pl.Buffered(1)),
                ],
                out_specs=pl.BlockSpec((TM, VCout), lambda i: (i, 0)),
            ),
            compiler_params=pltpu.CompilerParams(**cparams),
            cost_estimate=cost,
        )(Xc, Wop, bop)
    else:
        # Large-V*C path: don't fold identity(V) x WresT (wastes (V-1)/V of that half's MXU FLOPs
        # and doubles operator VMEM).  Pre-compute the tiny pre-ELU residual in the wrapper and
        # stream it as an extra lane-dense input.
        Wres, bres = params['res_weight'], params['res_bias']
        res_pre = (jnp.einsum('mvc,oc->mvo', x_tnvc.reshape(M, V, C), Wres)
                   + bres[None, None, :]).reshape(M, VCout).astype(jnp.float32)
        Wop = Lg.astype(compute_dtype)
        bop = bg
        res_row = VCout * 4
        fixed = int(Wop.size) * np.dtype(compute_dtype).itemsize + int(bop.size) * 4
        TM = _pick_tm(M, 2 * (x_row + out_row + res_row), fixed, num_cores)
        Mp = -(-M // TM) * TM
        if Mp != M:
            Xc = jnp.pad(Xc, ((0, Mp - M), (0, 0)))
            res_pre = jnp.pad(res_pre, ((0, Mp - M), (0, 0)))
        cost = pl.CostEstimate(flops=2 * Mp * VC * VCout,
                               transcendentals=3 * Mp * VCout,
                               bytes_accessed=Mp * (x_row + out_row + res_row) + fixed)
        out = pl.pallas_call(
            spatial_block_kernel_resin,
            out_shape=jax.ShapeDtypeStruct((Mp, VCout), out_dtype),
            grid_spec=pltpu.PrefetchScalarGridSpec(
                num_scalar_prefetch=0,
                grid=(Mp // TM,),
                in_specs=[
                    pl.BlockSpec((TM, VC), lambda i: (i, 0)),
                    pl.BlockSpec((VC, VCout), lambda i: (0, 0), pipeline_mode=pl.Buffered(1)),
                    pl.BlockSpec((1, VCout), lambda i: (0, 0), pipeline_mode=pl.Buffered(1)),
                    pl.BlockSpec((TM, VCout), lambda i: (i, 0)),
                ],
                out_specs=pl.BlockSpec((TM, VCout), lambda i: (i, 0)),
            ),
            compiler_params=pltpu.CompilerParams(**cparams),
            cost_estimate=cost,
        )(Xc, Wop, bop, res_pre)

    if Mp != M:
        out = out[:M]
    return out.reshape(T, N, V, Cout)


def spatial_block_forward(x, edge_index, edge_attr, params, kernel_size, is_open_spline, **kw):
    """Torch-layout compatibility wrapper: (N, V, C, T) in, (N, V, Cout, T) out.

    The two transposes below are a full extra HBM round trip each; callers that can adopt the
    replica-major layout at the module boundary should call spatial_block_forward_replica_major.
    """
    x_tnvc = jnp.transpose(x, (3, 0, 1, 2))
    out = spatial_block_forward_replica_major(x_tnvc, edge_index, edge_attr, params,
                                              kernel_size, is_open_spline, **kw)
    return jnp.transpose(out, (1, 2, 3, 0))


# ----------------------- pure-JAX reference (edge-based) ---------------------
def reference_forward(x, edge_index, edge_attr, params, kernel_size, is_open_spline):
    N, V, C, T = x.shape
    W, root, bias = params['weight'], params['root'], params['bias']
    Wres, bres = params['res_weight'], params['res_bias']
    Cout = root.shape[1]
    # residual: NCHW (N, C, T, V) -> 1x1 conv -> ELU
    x_nctv = jnp.transpose(x, (0, 2, 3, 1))
    res = jnp.einsum('nctv,oc->notv', x_nctv, Wres) + bres[None, :, None, None]
    res = _elu(res)
    # graph path (per-edge spline weighting + scatter_add, norm=False)
    Xf = jnp.transpose(x, (3, 0, 1, 2)).reshape(-1, C)      # (T*N*V, C)
    E_base = edge_index.shape[1] // N
    row0, col0 = edge_index[0, :E_base], edge_index[1, :E_base]
    basis, wi = spline_basis_deg1(edge_attr[:E_base], kernel_size, is_open_spline)
    reps = T * N
    off = (jnp.arange(reps, dtype=row0.dtype) * V)
    row = (row0[None, :] + off[:, None]).reshape(-1)
    col = (col0[None, :] + off[:, None]).reshape(-1)
    basis_f = jnp.tile(basis, (reps, 1))
    wi_f = jnp.tile(wi, (reps, 1))
    xcol = Xf[col]
    Wg = W[wi_f]                                            # (Ef, S, C, Cout)
    out_e = jnp.einsum('ec,esco,es->eo', xcol, Wg, basis_f)
    agg = jnp.zeros((reps * V, Cout), dtype=Xf.dtype).at[row].add(out_e)
    g = _elu(agg + Xf @ root + bias[None, :])
    g = jnp.transpose(g.reshape(T, N, V, Cout), (1, 3, 0, 2))   # (N, Cout, T, V)
    y = _elu(g + res)
    return jnp.transpose(y, (0, 3, 1, 2))                    # (N, V, Cout, T)


# ------------------------------------ main -----------------------------------
if __name__ == "__main__":
    N, V, C, T = 2, 16, 4, 8
    Cout = 8
    dim = 2
    ks_scalar = 3                       # Spatial_Block passes kernel_size[0] to Spline
    kernel_size = [ks_scalar] * dim
    is_open_spline = [1] * dim
    K = ks_scalar ** dim

    key = jax.random.PRNGKey(0)
    k_x, k_attr, k_w, k_root, k_b, k_cw, k_cb = jax.random.split(key, 7)

    x = jax.random.normal(k_x, (N, V, C, T), dtype=jnp.float32)

    # base graph: ring + reverse edges + self loops
    src = np.arange(V)
    edges = np.concatenate([
        np.stack([src, (src + 1) % V]),
        np.stack([(src + 1) % V, src]),
        np.stack([src, src]),
    ], axis=1)                                              # (2, 3V)
    E_base = edges.shape[1]
    # batch-expanded edge_index / edge_attr, as the PyTorch module receives them
    ei = np.concatenate([edges + V * b for b in range(N)], axis=1)
    edge_index = jnp.asarray(ei, dtype=jnp.int32)           # (2, N*E_base)
    attr_base = jax.random.uniform(k_attr, (E_base, dim), dtype=jnp.float32)
    edge_attr = jnp.tile(attr_base, (N, 1))                 # (N*E_base, dim)

    # deterministic parameter init (shapes per Spline/Conv2d __init__)
    bound = 1.0 / math.sqrt(C * K)
    cbound = 1.0 / math.sqrt(C)
    params = {
        'weight': jax.random.uniform(k_w, (K, C, Cout), minval=-bound, maxval=bound,
                                     dtype=jnp.float32),
        'root': jax.random.uniform(k_root, (C, Cout), minval=-bound, maxval=bound,
                                   dtype=jnp.float32),
        'bias': jax.random.uniform(k_b, (Cout,), minval=-bound, maxval=bound,
                                   dtype=jnp.float32),
        'res_weight': jax.random.uniform(k_cw, (Cout, C), minval=-cbound, maxval=cbound,
                                         dtype=jnp.float32),
        'res_bias': jax.random.uniform(k_cb, (Cout,), minval=-cbound, maxval=cbound,
                                       dtype=jnp.float32),
    }

    ref = reference_forward(x, edge_index, edge_attr, params, kernel_size, is_open_spline)

    # 1) torch-layout wrapper, f32 compute (tight check against the edge-based reference)
    out_f32 = spatial_block_forward(x, edge_index, edge_attr, params, kernel_size,
                                    is_open_spline, compute_dtype=jnp.float32)
    out_f32 = jax.block_until_ready(out_f32)
    assert out_f32.shape == (N, V, Cout, T)
    np.testing.assert_allclose(np.asarray(out_f32), np.asarray(ref), rtol=1e-4, atol=1e-4)

    # 2) default production config: bf16 X/operator, f32 accumulation + epilogue
    out_bf16 = jax.block_until_ready(
        spatial_block_forward(x, edge_index, edge_attr, params, kernel_size, is_open_spline))
    np.testing.assert_allclose(np.asarray(out_bf16), np.asarray(ref), rtol=5e-2, atol=5e-2)

    # 3) large-V*C kernel variant (operator without the block-diag residual half), f32 check
    out_split = jax.block_until_ready(
        spatial_block_forward(x, edge_index, edge_attr, params, kernel_size, is_open_spline,
                              compute_dtype=jnp.float32, split_residual=True))
    np.testing.assert_allclose(np.asarray(out_split), np.asarray(ref), rtol=1e-4, atol=1e-4)

    # 4) replica-major entry point (no wrapper transposes at all)
    x_tnvc = jnp.transpose(x, (3, 0, 1, 2))
    out_rm = jax.block_until_ready(
        spatial_block_forward_replica_major(x_tnvc, edge_index, edge_attr, params, kernel_size,
                                            is_open_spline, compute_dtype=jnp.float32))
    np.testing.assert_allclose(np.asarray(out_rm),
                               np.asarray(jnp.transpose(ref, (3, 0, 1, 2))),
                               rtol=1e-4, atol=1e-4)

    print("KERNEL_OK")
</pallas_src>

<mosaic_0001>
module attributes {stable_mosaic.version = 11 : i64} {
  func.func @spatial_block_kernel_fused(%arg0: i32, %arg1: memref<16x64xf32, #tpu.memory_space<vmem>>, %arg2: memref<64x256xf32, #tpu.memory_space<vmem>>, %arg3: memref<1x256xf32, #tpu.memory_space<vmem>>, %arg4: memref<16x128xf32, #tpu.memory_space<vmem>>) attributes {dimension_semantics = [#tpu.dimension_semantics<parallel>], iteration_bounds = array<i64: 1>, scalar_prefetch = 0 : i64, scratch_operands = 0 : i64, tpu.core_type = #tpu.core_type<tc>, window_params = [{transform_indices = @transform_0, window_bounds = array<i64: 16, 64>}, {pipeline_mode = #tpu.pipeline_mode<synchronous>, transform_indices = @transform_1, window_bounds = array<i64: 64, 256>}, {pipeline_mode = #tpu.pipeline_mode<synchronous>, transform_indices = @transform_2, window_bounds = array<i64: 1, 256>}, {transform_indices = @transform_3, window_bounds = array<i64: 16, 128>}]} {
    %c0 = arith.constant 0 : index
    %c0_0 = arith.constant 0 : index
    %0 = vector.load %arg1[%c0, %c0_0] : memref<16x64xf32, #tpu.memory_space<vmem>>, vector<16x64xf32>
    %c0_1 = arith.constant 0 : index
    %c0_2 = arith.constant 0 : index
    %1 = vector.load %arg2[%c0_1, %c0_2] : memref<64x256xf32, #tpu.memory_space<vmem>>, vector<64x256xf32>
    %cst = arith.constant dense<0.000000e+00> : vector<16x256xf32>
    %2 = tpu.matmul %0, %1, %cst {dimension_numbers = #tpu.dot_dimension_numbers<[1], [0], [0], [1], [0, 0, 1, 1], [], []>} : vector<16x64xf32>, vector<64x256xf32>, vector<16x256xf32> -> vector<16x256xf32>
    %c0_3 = arith.constant 0 : index
    %c0_4 = arith.constant 0 : index
    %3 = vector.load %arg3[%c0_3, %c0_4] : memref<1x256xf32, #tpu.memory_space<vmem>>, vector<1x256xf32>
    %4 = vector.broadcast %3 : vector<1x256xf32> to vector<16x256xf32>
    %5 = arith.addf %2, %4 : vector<16x256xf32>
    %6 = vector.extract_strided_slice %5 {offsets = [0, 0], sizes = [16, 128], strides = [1, 1]} : vector<16x256xf32> to vector<16x128xf32>
    %cst_5 = arith.constant 0.000000e+00 : f32
    %7 = vector.broadcast %cst_5 : f32 to vector<16x128xf32>
    %8 = arith.cmpf ogt, %6, %7 : vector<16x128xf32>
    %cst_6 = arith.constant 0.000000e+00 : f32
    %9 = vector.broadcast %cst_6 : f32 to vector<16x128xf32>
    %10 = arith.minimumf %6, %9 : vector<16x128xf32>
    %11 = math.exp %10 : vector<16x128xf32>
    %cst_7 = arith.constant 1.000000e+00 : f32
    %12 = vector.broadcast %cst_7 : f32 to vector<16x128xf32>
    %13 = arith.subf %11, %12 : vector<16x128xf32>
    %14 = arith.select %8, %6, %13 : vector<16x128xi1>, vector<16x128xf32>
    %15 = vector.extract_strided_slice %5 {offsets = [0, 128], sizes = [16, 128], strides = [1, 1]} : vector<16x256xf32> to vector<16x128xf32>
    %cst_8 = arith.constant 0.000000e+00 : f32
    %16 = vector.broadcast %cst_8 : f32 to vector<16x128xf32>
    %17 = arith.cmpf ogt, %15, %16 : vector<16x128xf32>
    %cst_9 = arith.constant 0.000000e+00 : f32
    %18 = vector.broadcast %cst_9 : f32 to vector<16x128xf32>
    %19 = arith.minimumf %15, %18 : vector<16x128xf32>
    %20 = math.exp %19 : vector<16x128xf32>
    %cst_10 = arith.constant 1.000000e+00 : f32
    %21 = vector.broadcast %cst_10 : f32 to vector<16x128xf32>
    %22 = arith.subf %20, %21 : vector<16x128xf32>
    %23 = arith.select %17, %15, %22 : vector<16x128xi1>, vector<16x128xf32>
    %24 = arith.addf %14, %23 : vector<16x128xf32>
    %cst_11 = arith.constant 0.000000e+00 : f32
    %25 = vector.broadcast %cst_11 : f32 to vector<16x128xf32>
    %26 = arith.cmpf ogt, %24, %25 : vector<16x128xf32>
    %cst_12 = arith.constant 0.000000e+00 : f32
    %27 = vector.broadcast %cst_12 : f32 to vector<16x128xf32>
    %28 = arith.minimumf %24, %27 : vector<16x128xf32>
    %29 = math.exp %28 : vector<16x128xf32>
    %cst_13 = arith.constant 1.000000e+00 : f32
    %30 = vector.broadcast %cst_13 : f32 to vector<16x128xf32>
    %31 = arith.subf %29, %30 : vector<16x128xf32>
    %32 = arith.select %26, %24, %31 : vector<16x128xi1>, vector<16x128xf32>
    %c0_14 = arith.constant 0 : index
    %c0_15 = arith.constant 0 : index
    %33 = vector.load %arg4[%c0_14, %c0_15] : memref<16x128xf32, #tpu.memory_space<vmem>>, vector<16x128xf32>
    tpu.vector_store %arg4[%c0_14, %c0_15], %32 {strides = array<i32>} : memref<16x128xf32, #tpu.memory_space<vmem>>, vector<16x128xf32>,
    return
  }
  func.func @transform_0(%arg0: i32) -> (i32, i32) {
    %c0_i32 = arith.constant 0 : i32
    %c0_i32_0 = arith.constant 0 : i32
    return %arg0, %c0_i32 : i32, i32
  }
  func.func @transform_1(%arg0: i32) -> (i32, i32) {
    %c0_i32 = arith.constant 0 : i32
    %c0_i32_0 = arith.constant 0 : i32
    %c0_i32_1 = arith.constant 0 : i32
    return %c0_i32, %c0_i32_0 : i32, i32
  }
  func.func @transform_2(%arg0: i32) -> (i32, i32) {
    %c0_i32 = arith.constant 0 : i32
    %c0_i32_0 = arith.constant 0 : i32
    %c0_i32_1 = arith.constant 0 : i32
    return %c0_i32, %c0_i32_0 : i32, i32
  }
  func.func @transform_3(%arg0: i32) -> (i32, i32) {
    %c0_i32 = arith.constant 0 : i32
    %c0_i32_0 = arith.constant 0 : i32
    return %arg0, %c0_i32 : i32, i32
  }
}

</mosaic_0001>

<llo_original>
// kernel: tpu_custom_call.1
$region0: #{tpu_custom_call.1}
  #allocation0 [shape = 'u32[]', space=smem, size = 0x4, offset = 0x4, fixed_abs, tag = 'smem constant byte address 0x4 - core index']
  #allocation1 [shape = 'u32[72,128]{1,0:T(1,128)}', space=vmem, size = 0x9000, scoped, tag = 'internal scratch']
  %s0 = inlined_call_operand.hbm [shape: f32[16,64], index: 0, kind: input, shape index: {}]
  %s1 = inlined_call_operand.hbm [shape: f32[64,256], index: 1, kind: input, shape index: {}]
  %s2 = inlined_call_operand.hbm [shape: f32[1,256], index: 2, kind: input, shape index: {}]
  %s3 = inlined_call_operand.hbm [shape: f32[16,128], index: 3, kind: output, shape index: {}]
  %s4 = sld [smem:[#allocation0]]
  $region34: #{tpu_custom_call.1} parent=0
    _
  %s6 = ssub.s32 1, %s4
  %s7 = scalar_select 0, %s6, %s4
  $region1: #{tpu_custom_call.1} parent=0
    #allocation2 [shape = 'u8[8192]{0}', space=vmem, size = 0x2000, scoped, tag = 'input window, operand 0, single buffered']
    #allocation3 [shape = 's32[1]{0}', space=sflag, size = 0x4, scoped, tag = 'scoped memory for tpu_custom_call.1']
    #allocation4 [shape = 's32[1]{0}', space=sflag, size = 0x4, scoped, tag = 'scoped memory for tpu_custom_call.1']
    #allocation5 [shape = 'u8[65536]{0}', space=vmem, size = 0x10000, scoped, tag = 'input window, operand 1, single buffered']
    #allocation6 [shape = 's32[1]{0}', space=sflag, size = 0x4, scoped, tag = 'scoped memory for tpu_custom_call.1']
    #allocation7 [shape = 'u8[1024]{0}', space=vmem, size = 0x400, scoped, tag = 'input window, operand 2, single buffered']
    #allocation8 [shape = 'u8[8192]{0}', space=vmem, size = 0x2000, scoped, tag = 'output window, operand 0, single buffered']
    %8 = vsyncpa [#allocation3], 0
    %9 = vsyncpa [#allocation6], 0
    %10 = vsyncpa [#allocation4], 0
    // Predicated region
    $region2: #{tpu_custom_call.1} parent=1 // pred_check
      _
    $region3: #{tpu_custom_call.1} parent=1 // pred_check_branch
      %12 = sbr.rel (0) target = $region5
    $region4: #{tpu_custom_call.1} parent=1 // pred_region
      %14 = vsyncadd [#allocation3], 0
      %s15 = sshll.u32 %s0, 4
      %s16 = int_to_ptr.hbm [resolvable:$true] %s15
      %s17 = sshll.u32 [#allocation2], 4
      %s18 = int_to_ptr.vmem [resolvable:$true] %s17
      %23 = dma.hbm_to_vmem [thread:$0]  %s16, 256, %s18, [#allocation3], 128, 128, 8
    $region5: #{tpu_custom_call.1} parent=1 // pred_fallthru
      _
    // Predicated region
    $region6: #{tpu_custom_call.1} parent=1 // pred_check
      _
    $region7: #{tpu_custom_call.1} parent=1 // pred_check_branch
      %25 = sbr.rel (0) target = $region9
    $region8: #{tpu_custom_call.1} parent=1 // pred_region
      %27 = vsyncadd [#allocation6], 0
      %s28 = sshll.u32 %s1, 4
      %s29 = int_to_ptr.hbm [resolvable:$true] %s28
      %s30 = sshll.u32 [#allocation5], 4
      %s31 = int_to_ptr.vmem [resolvable:$true] %s30
      %36 = dma.hbm_to_vmem [thread:$0]  %s29, 2048, %s31, [#allocation6], 256, 256, 16
    $region9: #{tpu_custom_call.1} parent=1 // pred_fallthru
      _
    // Predicated region
    $region10: #{tpu_custom_call.1} parent=1 // pred_check
      _
    $region11: #{tpu_custom_call.1} parent=1 // pred_check_branch
      %38 = sbr.rel (0) target = $region13
    $region12: #{tpu_custom_call.1} parent=1 // pred_region
      %40 = vsyncadd [#allocation6], 0
      %s42 = sshll.u32 %s2, 4
      %s43 = int_to_ptr.hbm [resolvable:$true] %s42
      %s44 = sshll.u32 [#allocation7], 4
      %s45 = int_to_ptr.vmem [resolvable:$true] %s44
      %47 = dma.hbm_to_vmem [thread:$0]  %s43, 32, %s45, [#allocation6]
    $region13: #{tpu_custom_call.1} parent=1 // pred_fallthru
      _
    // Predicated region
    $region14: #{tpu_custom_call.1} parent=1 // pred_check
      _
    $region15: #{tpu_custom_call.1} parent=1 // pred_check_branch
      %49 = sbr.rel (0) target = $region17
    $region16: #{tpu_custom_call.1} parent=1 // pred_region
      %51 = dma.done [#allocation3], 256
    $region17: #{tpu_custom_call.1} parent=1 // pred_fallthru
      _
    // Predicated region
    $region18: #{tpu_custom_call.1} parent=1 // pred_check
      _
    $region19: #{tpu_custom_call.1} parent=1 // pred_check_branch
      %53 = sbr.rel (0) target = $region21
    $region20: #{tpu_custom_call.1} parent=1 // pred_region
      %55 = dma.done [#allocation6], 2048
    $region21: #{tpu_custom_call.1} parent=1 // pred_fallthru
      _
    // Predicated region
    $region22: #{tpu_custom_call.1} parent=1 // pred_check
      _
    $region23: #{tpu_custom_call.1} parent=1 // pred_check_branch
      %57 = sbr.rel (0) target = $region25
    $region24: #{tpu_custom_call.1} parent=1 // pred_region
      %59 = dma.done [#allocation6], 32
    $region25: #{tpu_custom_call.1} parent=1 // pred_fallthru
      _
    %v60 = vld [vmem:[#allocation2] sm:$0xff]
    %v61 = vld [vmem:[#allocation2 + $0x8] sm:$0xff]
    %v62 = vld [vmem:[#allocation5] sm:$0xff]
    %v63 = vld [vmem:[#allocation5 + $0x8] sm:$0xff]
    %v64 = vld [vmem:[#allocation5 + $0x10] sm:$0xff]
    %v65 = vld [vmem:[#allocation5 + $0x18] sm:$0xff]
    %v66 = vld [vmem:[#allocation5 + $0x20] sm:$0xff]
    %v67 = vld [vmem:[#allocation5 + $0x28] sm:$0xff]
    %v68 = vld [vmem:[#allocation5 + $0x30] sm:$0xff]
    %v69 = vld [vmem:[#allocation5 + $0x38] sm:$0xff]
    %v70 = vld [vmem:[#allocation5 + $0x40] sm:$0xff]
    %v71 = vld [vmem:[#allocation5 + $0x48] sm:$0xff]
    %v72 = vld [vmem:[#allocation5 + $0x50] sm:$0xff]
    %v73 = vld [vmem:[#allocation5 + $0x58] sm:$0xff]
    %v74 = vld [vmem:[#allocation5 + $0x60] sm:$0xff]
    %v75 = vld [vmem:[#allocation5 + $0x68] sm:$0xff]
    %v76 = vld [vmem:[#allocation5 + $0x70] sm:$0xff]
    %v77 = vld [vmem:[#allocation5 + $0x78] sm:$0xff]
    %v78 = vld [vmem:[#allocation7] sm:$0x3]
    %v80 = vperm.slane %v78, 0
    %v81 = vperm.slane %v78, 1
    %vm84 = vcmask 523264
    %v86 = vsel %vm84, %v60, 0
    %v89 = vsel %vm84, %v61, 0
    %91 = vmatpush.msra.mxu0 0.0
    %92 = vmatpush.msra.mxu0 0.0
    %93 = vmatpush.msra.mxu0 0.0
    %94 = vmatpush.msra.mxu0 0.0
    %95 = vmatpush.msra.mxu0 0.0
    %96 = vmatpush.msra.mxu0 0.0
    %97 = vmatpush.msra.mxu0 0.0
    %98 = vmatpush.msra.mxu0 0.0
    %99 = vmatpush.msra.mxu0 %v76
    %100 = vmatpush.msra.mxu0 %v74
    %101 = vmatpush.msra.mxu0 %v72
    %102 = vmatpush.msra.mxu0 %v70
    %103 = vmatpush.msra.mxu0 %v68
    %104 = vmatpush.msra.mxu0 %v66
    %105 = vmatpush.msra.mxu0 %v64
    %106 = vmatpush.msra.mxu0 %v62
    %107 = vmatmul.f32.gmra.mxu0 %v86
    %v108 = vpop.f32.mrf.mxu0
    %v109 = vadd.f32 %v80, %v108
    %110 = vmatmul.f32.gmra.mxu0 %v89
    %v111 = vpop.f32.mrf.mxu0
    %v112 = vadd.f32 %v80, %v111
    %113 = vdwg.mxu0
    %114 = vmatpush.msra.mxu0 0.0
    %115 = vmatpush.msra.mxu0 0.0
    %116 = vmatpush.msra.mxu0 0.0
    %117 = vmatpush.msra.mxu0 0.0
    %118 = vmatpush.msra.mxu0 0.0
    %119 = vmatpush.msra.mxu0 0.0
    %120 = vmatpush.msra.mxu0 0.0
    %121 = vmatpush.msra.mxu0 0.0
    %122 = vmatpush.msra.mxu0 %v77
    %123 = vmatpush.msra.mxu0 %v75
    %124 = vmatpush.msra.mxu0 %v73
    %125 = vmatpush.msra.mxu0 %v71
    %126 = vmatpush.msra.mxu0 %v69
    %127 = vmatpush.msra.mxu0 %v67
    %128 = vmatpush.msra.mxu0 %v65
    %129 = vmatpush.msra.mxu0 %v63
    %130 = vmatmul.f32.gmra.mxu0 %v86
    %v131 = vpop.f32.mrf.mxu0
    %v132 = vadd.f32 %v81, %v131
    %133 = vmatmul.f32.gmra.mxu0 %v89
    %v134 = vpop.f32.mrf.mxu0
    %v135 = vadd.f32 %v81, %v134
    %136 = vdwg.mxu0
    %vm137 = vcmp.gt.f32.partialorder %v109, 0.0
    %vm138 = vcmp.gt.f32.partialorder %v112, 0.0
    %v139 = vmin.f32 %v109, 0.0
    %v140 = vmin.f32 %v112, 0.0
    %v141 = vmul.f32 %v139, 1.442695
    %v142 = vpow.pop %v141
    %v143 = vmul.f32 %v140, 1.442695
    %v144 = vpow.pop %v143
    %v145 = vsub.f32 %v142, 1.0
    %v146 = vsub.f32 %v144, 1.0
    %v147 = vsel %vm137, %v109, %v145
    %v148 = vsel %vm138, %v112, %v146
    %vm149 = vcmp.gt.f32.partialorder %v132, 0.0
    %vm150 = vcmp.gt.f32.partialorder %v135, 0.0
    %v151 = vmin.f32 %v132, 0.0
    %v152 = vmin.f32 %v135, 0.0
    %v153 = vmul.f32 %v151, 1.442695
    %v154 = vpow.pop %v153
    %v155 = vmul.f32 %v152, 1.442695
    %v156 = vpow.pop %v155
    %v157 = vsub.f32 %v154, 1.0
    %v158 = vsub.f32 %v156, 1.0
    %v159 = vsel %vm149, %v132, %v157
    %v160 = vsel %vm150, %v135, %v158
    %v161 = vadd.f32 %v147, %v159
    %v162 = vadd.f32 %v148, %v160
    %vm163 = vcmp.gt.f32.partialorder %v161, 0.0
    %vm164 = vcmp.gt.f32.partialorder %v162, 0.0
    %v165 = vmin.f32 %v161, 0.0
    %v166 = vmin.f32 %v162, 0.0
    %v167 = vmul.f32 %v165, 1.442695
    %v168 = vpow.pop %v167
    %v169 = vmul.f32 %v166, 1.442695
    %v170 = vpow.pop %v169
    %v171 = vsub.f32 %v168, 1.0
    %v172 = vsub.f32 %v170, 1.0
    %v173 = vsel %vm163, %v161, %v171
    %v174 = vsel %vm164, %v162, %v172
    %175 = vst [vmem:[#allocation8] sm:$0xff] %v173
    %176 = vst [vmem:[#allocation8 + $0x8] sm:$0xff] %v174
    // Predicated region
    $region26: #{tpu_custom_call.1} parent=1 // pred_check
      _
    $region27: #{tpu_custom_call.1} parent=1 // pred_check_branch
      %178 = sbr.rel (0) target = $region29
    $region28: #{tpu_custom_call.1} parent=1 // pred_region
      %180 = vsyncadd [#allocation4], 0
      %s181 = sshll.u32 [#allocation8], 4
      %s182 = int_to_ptr.vmem [resolvable:$true] %s181
      %s183 = sshll.u32 %s3, 4
      %s184 = int_to_ptr.hbm [resolvable:$true] %s183
      %189 = dma.vmem_to_hbm [thread:$0]  %s182, 256, %s184, [#allocation4], 128, 128, 8
    $region29: #{tpu_custom_call.1} parent=1 // pred_fallthru
      _
    // Predicated region
    $region30: #{tpu_custom_call.1} parent=1 // pred_check
      _
    $region31: #{tpu_custom_call.1} parent=1 // pred_check_branch
      %191 = sbr.rel (0) target = $region33
    $region32: #{tpu_custom_call.1} parent=1 // pred_region
      %193 = dma.done [#allocation4], 256
    $region33: #{tpu_custom_call.1} parent=1 // pred_fallthru
      _
    %194 = vsyncpa [#allocation3], 1
    %195 = vsyncpa [#allocation6], 1
    %196 = vsyncpa [#allocation4], 1

</llo_original>
